<compile_context>
chip_gen: v6e
topology: v6e:2x2x1
jax: 0.10.0
libtpu: 0.0.40
codegen_flags: <defaults>
</compile_context>

<pallas_src>
import functools

import jax
import jax.numpy as jnp
from jax.experimental import pallas as pl
from jax.experimental.pallas import tpu as pltpu

_LANE = 128
_SUBLANE_BF16 = 16          # bf16 packs 16 sublanes per vreg


def _round_up(x, m):
    return (x + m - 1) // m * m


def _choose_block_m(m):
    """Large M tiles (amortize per-step overhead) while keeping grid >= 2 when possible."""
    if m < 2 * _SUBLANE_BF16:
        # Tiny batch: one grid step covering the whole (padded) batch.
        return _round_up(max(m, _SUBLANE_BF16), _SUBLANE_BF16)
    # At least 2 grid steps (v7x megacore sharding of the "parallel" axis),
    # with tiles capped at 1024 rows.
    half = _round_up((m + 1) // 2, _SUBLANE_BF16)
    return min(1024, half)


def _make_fused_mlp_kernel(activations):
    n_layers = len(activations)

    def kernel(x_ref, *refs):
        # refs = (w0, b0, w1, b1, ..., w_{L-1}, b_{L-1}, o_ref)
        o_ref = refs[-1]
        h = x_ref[...]                                   # bf16, straight to the MXU
        for li in range(n_layers):
            w_ref = refs[2 * li]
            b_ref = refs[2 * li + 1]
            # MXU matmul: bf16 operands, f32 accumulation.
            y = jnp.dot(h, w_ref[...], preferred_element_type=jnp.float32)
            y = y + b_ref[...]            # (1, N) f32 bias broadcasts over rows
            act = activations[li]
            if act == "relu":
                y = jnp.maximum(y, 0.0)
            elif act == "tanh":
                y = jnp.tanh(y)
            elif act == "identity":
                pass
            else:
                raise ValueError(f"unsupported activation: {act}")
            if li + 1 < n_layers:
                h = y.astype(refs[2 * (li + 1)].dtype)   # bf16 hand-off to next MXU pass
            else:
                h = y                                    # final layer stays f32
        o_ref[...] = h.astype(o_ref.dtype)

    return kernel


@functools.partial(jax.jit, static_argnames=("activations", "block_m"))
def _fused_mlp_call(x_p, flat_params, activations, block_m):
    Mp, K0p = x_p.shape
    n_layers = len(activations)
    out_dtype = jnp.float32                              # pinned: do not follow bf16 input

    in_specs = [pl.BlockSpec((block_m, K0p), lambda i: (i, 0))]
    flops = 0
    transcendentals = 0
    bytes_accessed = Mp * K0p * jnp.dtype(x_p.dtype).itemsize
    for li in range(n_layers):
        w = flat_params[2 * li]
        b = flat_params[2 * li + 1]
        Kw, Nw = w.shape
        # Weights/biases: same block every grid step -> stay resident in VMEM.
        in_specs.append(pl.BlockSpec((Kw, Nw), lambda i: (0, 0)))
        in_specs.append(pl.BlockSpec((1, Nw), lambda i: (0, 0)))
        flops += 2 * Mp * Kw * Nw
        bytes_accessed += (Kw * Nw * jnp.dtype(w.dtype).itemsize
                           + Nw * jnp.dtype(b.dtype).itemsize)
        if activations[li] == "tanh":
            transcendentals += Mp * Nw
    n_last = flat_params[-2].shape[1]
    bytes_accessed += Mp * n_last * jnp.dtype(out_dtype).itemsize

    return pl.pallas_call(
        _make_fused_mlp_kernel(activations),
        out_shape=jax.ShapeDtypeStruct((Mp, n_last), out_dtype),
        grid=(Mp // block_m,),
        in_specs=in_specs,
        out_specs=pl.BlockSpec((block_m, n_last), lambda i: (i, 0)),
        compiler_params=pltpu.CompilerParams(
            dimension_semantics=("parallel",),      # megacore-shard batch axis (v7x)
            vmem_limit_bytes=32 * 1024 * 1024,      # within all generations' budgets
        ),
        cost_estimate=pl.CostEstimate(
            flops=flops,
            transcendentals=transcendentals,
            bytes_accessed=bytes_accessed,
        ),
    )(x_p, *flat_params)


def init_mlp_params(key, size_h_layers):
    """torch.nn.Linear-style init (U[-1/sqrt(fan_in), 1/sqrt(fan_in)]), stored (in, out)."""
    params = []
    for i in range(len(size_h_layers) - 1):
        fan_in, fan_out = size_h_layers[i], size_h_layers[i + 1]
        key, kw, kb = jax.random.split(key, 3)
        bound = 1.0 / (fan_in ** 0.5)
        w = jax.random.uniform(kw, (fan_in, fan_out), jnp.float32, -bound, bound)
        b = jax.random.uniform(kb, (fan_out,), jnp.float32, -bound, bound)
        params.append((w, b))
    return params


def pad_mlp_params(params, compute_dtype=jnp.bfloat16):
    """Zero-pad (w, b) for the kernel.

    * All N dims -> 128-lane multiples (lane-dense stores, full-width MXU passes).
    * Layer-0 K stays at its true width (padded only to a 16-sublane multiple)
      so the x HBM stream is not inflated; inner K dims match the previous
      layer's padded N (128-multiples).
    * Weights cast to bf16 for the MXU; biases stay f32 (f32 epilogue).
    Zero padding is inert: padded rows/cols/bias entries are zero and
    relu(0) = tanh(0) = 0.
    """
    flat = []
    for li, (w, b) in enumerate(params):
        K, N = w.shape
        Kp = _round_up(K, _SUBLANE_BF16) if li == 0 else _round_up(K, _LANE)
        Np = _round_up(N, _LANE)
        wp = jnp.zeros((Kp, Np), compute_dtype).at[:K, :N].set(w.astype(compute_dtype))
        bp = jnp.zeros((1, Np), jnp.float32).at[:, :N].set(b.reshape(1, N))
        flat += [wp, bp]
    return tuple(flat)


def mlp_forward(x, padded_params, activations, out_features):
    """Equivalent of MLP.forward: the whole Linear/activation chain in one Pallas kernel."""
    M, K = x.shape
    K0p = padded_params[0].shape[0]
    block_m = _choose_block_m(M)
    Mp = _round_up(M, block_m)
    # Fold the bf16 cast into the (cheap) batch/K pad; K0p is the true K rounded
    # to a 16-sublane multiple, not 128.
    x_p = jnp.zeros((Mp, K0p), jnp.bfloat16).at[:M, :K].set(x.astype(jnp.bfloat16))
    out_p = _fused_mlp_call(x_p, padded_params, tuple(activations), block_m)
    return out_p[:M, :out_features]


# ----------------------------- references ---------------------------------

def mlp_forward_ref_f32(x, params, activations):
    """Exact f32 forward (PyTorch semantics)."""
    for (w, b), act in zip(params, activations):
        x = x @ w + b
        if act == "relu":
            x = jnp.maximum(x, 0.0)
        elif act == "tanh":
            x = jnp.tanh(x)
    return x


def mlp_forward_ref_bf16(x, padded_params, activations, out_features):
    """Pure-JAX emulation of the kernel's numerics (bf16 MXU operands, f32 epilogue)."""
    M, K = x.shape
    K0p = padded_params[0].shape[0]
    h = jnp.zeros((M, K0p), jnp.bfloat16).at[:, :K].set(x.astype(jnp.bfloat16))
    for li, act in enumerate(activations):
        w = padded_params[2 * li]
        b = padded_params[2 * li + 1]
        y = jnp.dot(h, w, preferred_element_type=jnp.float32) + b
        if act == "relu":
            y = jnp.maximum(y, 0.0)
        elif act == "tanh":
            y = jnp.tanh(y)
        h = y.astype(jnp.bfloat16) if li + 1 < len(activations) else y
    return h[:, :out_features]


if __name__ == "__main__":
    # Mirrors MLP(size_h_layers=[32, 64, 48, 16], activations=[ReLU(), Tanh(), Identity()])
    size_h_layers = [32, 64, 48, 16]
    activations = ("relu", "tanh", "identity")
    batch = 8

    key = jax.random.PRNGKey(0)
    key, kx = jax.random.split(key)
    x = jax.random.normal(kx, (batch, size_h_layers[0]), jnp.float32)

    params = init_mlp_params(key, size_h_layers)     # f32, PyTorch-style init
    padded_params = pad_mlp_params(params)           # lane-padded, bf16 weights

    out = mlp_forward(x, padded_params, activations, size_h_layers[-1])
    out = jax.block_until_ready(out)
    assert out.shape == (batch, size_h_layers[-1])
    assert out.dtype == jnp.float32                  # output dtype pinned explicitly

    # Tight check vs a reference that matches the kernel's numerics.
    ref_bf16 = mlp_forward_ref_bf16(x, padded_params, activations, size_h_layers[-1])
    assert jnp.allclose(out, ref_bf16, atol=5e-3, rtol=5e-3), "mismatch vs bf16 reference"

    # Sanity vs the exact f32 forward (looser: bf16 MXU operands / bf16 input).
    ref_f32 = mlp_forward_ref_f32(x, params, activations)
    assert jnp.allclose(out, ref_f32, atol=5e-2, rtol=5e-2), "mismatch vs f32 reference"

    # Exercise the grid == 2 / batch-padding path (medium batch).
    key, kx2 = jax.random.split(key)
    x_big = jax.random.normal(kx2, (200, size_h_layers[0]), jnp.float32)
    out_big = jax.block_until_ready(
        mlp_forward(x_big, padded_params, activations, size_h_layers[-1]))
    ref_big = mlp_forward_ref_bf16(x_big, padded_params, activations, size_h_layers[-1])
    assert out_big.shape == (200, size_h_layers[-1])
    assert jnp.allclose(out_big, ref_big, atol=5e-3, rtol=5e-3), "mismatch (batch=200)"

    # Exercise the large-tile path (block_m in the 512-1024 range, grid >= 2).
    key, kx3 = jax.random.split(key)
    x_huge = jax.random.normal(kx3, (1536, size_h_layers[0]), jnp.float32)
    out_huge = jax.block_until_ready(
        mlp_forward(x_huge, padded_params, activations, size_h_layers[-1]))
    ref_huge = mlp_forward_ref_bf16(x_huge, padded_params, activations, size_h_layers[-1])
    assert out_huge.shape == (1536, size_h_layers[-1])
    assert jnp.allclose(out_huge, ref_huge, atol=5e-3, rtol=5e-3), "mismatch (batch=1536)"

    print("KERNEL_OK")
</pallas_src>

<mosaic_0001>
module attributes {stable_mosaic.version = 11 : i64} {
  func.func @kernel(%arg0: i32, %arg1: memref<16x32xbf16, #tpu.memory_space<vmem>>, %arg2: memref<32x128xbf16, #tpu.memory_space<vmem>>, %arg3: memref<1x128xf32, #tpu.memory_space<vmem>>, %arg4: memref<128x128xbf16, #tpu.memory_space<vmem>>, %arg5: memref<1x128xf32, #tpu.memory_space<vmem>>, %arg6: memref<128x128xbf16, #tpu.memory_space<vmem>>, %arg7: memref<1x128xf32, #tpu.memory_space<vmem>>, %arg8: memref<16x128xf32, #tpu.memory_space<vmem>>) attributes {dimension_semantics = [#tpu.dimension_semantics<parallel>], iteration_bounds = array<i64: 1>, scalar_prefetch = 0 : i64, scratch_operands = 0 : i64, tpu.core_type = #tpu.core_type<tc>, window_params = [{transform_indices = @transform_0, window_bounds = array<i64: 16, 32>}, {pipeline_mode = #tpu.pipeline_mode<synchronous>, transform_indices = @transform_1, window_bounds = array<i64: 32, 128>}, {pipeline_mode = #tpu.pipeline_mode<synchronous>, transform_indices = @transform_2, window_bounds = array<i64: 1, 128>}, {pipeline_mode = #tpu.pipeline_mode<synchronous>, transform_indices = @transform_3, window_bounds = array<i64: 128, 128>}, {pipeline_mode = #tpu.pipeline_mode<synchronous>, transform_indices = @transform_4, window_bounds = array<i64: 1, 128>}, {pipeline_mode = #tpu.pipeline_mode<synchronous>, transform_indices = @transform_5, window_bounds = array<i64: 128, 128>}, {pipeline_mode = #tpu.pipeline_mode<synchronous>, transform_indices = @transform_6, window_bounds = array<i64: 1, 128>}, {transform_indices = @transform_7, window_bounds = array<i64: 16, 128>}]} {
    %c0 = arith.constant 0 : index
    %c0_0 = arith.constant 0 : index
    %0 = vector.load %arg1[%c0, %c0_0] : memref<16x32xbf16, #tpu.memory_space<vmem>>, vector<16x32xbf16>
    %c0_1 = arith.constant 0 : index
    %c0_2 = arith.constant 0 : index
    %1 = vector.load %arg2[%c0_1, %c0_2] : memref<32x128xbf16, #tpu.memory_space<vmem>>, vector<32x128xbf16>
    %cst = arith.constant dense<0.000000e+00> : vector<16x128xf32>
    %2 = tpu.matmul %0, %1, %cst {dimension_numbers = #tpu.dot_dimension_numbers<[1], [0], [0], [1], [0, 0, 1, 1], [], []>} : vector<16x32xbf16>, vector<32x128xbf16>, vector<16x128xf32> -> vector<16x128xf32>
    %c0_3 = arith.constant 0 : index
    %c0_4 = arith.constant 0 : index
    %3 = vector.load %arg3[%c0_3, %c0_4] : memref<1x128xf32, #tpu.memory_space<vmem>>, vector<1x128xf32>
    %4 = vector.broadcast %3 : vector<1x128xf32> to vector<16x128xf32>
    %5 = arith.addf %2, %4 : vector<16x128xf32>
    %cst_5 = arith.constant 0.000000e+00 : f32
    %6 = vector.broadcast %cst_5 : f32 to vector<16x128xf32>
    %7 = arith.maximumf %5, %6 : vector<16x128xf32>
    %8 = arith.truncf %7 : vector<16x128xf32> to vector<16x128xbf16>
    %c0_6 = arith.constant 0 : index
    %c0_7 = arith.constant 0 : index
    %9 = vector.load %arg4[%c0_6, %c0_7] : memref<128x128xbf16, #tpu.memory_space<vmem>>, vector<128x128xbf16>
    %cst_8 = arith.constant dense<0.000000e+00> : vector<16x128xf32>
    %10 = tpu.matmul %8, %9, %cst_8 {dimension_numbers = #tpu.dot_dimension_numbers<[1], [0], [0], [1], [0, 0, 1, 1], [], []>} : vector<16x128xbf16>, vector<128x128xbf16>, vector<16x128xf32> -> vector<16x128xf32>
    %c0_9 = arith.constant 0 : index
    %c0_10 = arith.constant 0 : index
    %11 = vector.load %arg5[%c0_9, %c0_10] : memref<1x128xf32, #tpu.memory_space<vmem>>, vector<1x128xf32>
    %12 = vector.broadcast %11 : vector<1x128xf32> to vector<16x128xf32>
    %13 = arith.addf %10, %12 : vector<16x128xf32>
    %14 = math.tanh %13 : vector<16x128xf32>
    %15 = arith.truncf %14 : vector<16x128xf32> to vector<16x128xbf16>
    %c0_11 = arith.constant 0 : index
    %c0_12 = arith.constant 0 : index
    %16 = vector.load %arg6[%c0_11, %c0_12] : memref<128x128xbf16, #tpu.memory_space<vmem>>, vector<128x128xbf16>
    %cst_13 = arith.constant dense<0.000000e+00> : vector<16x128xf32>
    %17 = tpu.matmul %15, %16, %cst_13 {dimension_numbers = #tpu.dot_dimension_numbers<[1], [0], [0], [1], [0, 0, 1, 1], [], []>} : vector<16x128xbf16>, vector<128x128xbf16>, vector<16x128xf32> -> vector<16x128xf32>
    %c0_14 = arith.constant 0 : index
    %c0_15 = arith.constant 0 : index
    %18 = vector.load %arg7[%c0_14, %c0_15] : memref<1x128xf32, #tpu.memory_space<vmem>>, vector<1x128xf32>
    %19 = vector.broadcast %18 : vector<1x128xf32> to vector<16x128xf32>
    %20 = arith.addf %17, %19 : vector<16x128xf32>
    %c0_16 = arith.constant 0 : index
    %c0_17 = arith.constant 0 : index
    %21 = vector.load %arg8[%c0_16, %c0_17] : memref<16x128xf32, #tpu.memory_space<vmem>>, vector<16x128xf32>
    tpu.vector_store %arg8[%c0_16, %c0_17], %20 {strides = array<i32>} : memref<16x128xf32, #tpu.memory_space<vmem>>, vector<16x128xf32>,
    return
  }
  func.func @transform_0(%arg0: i32) -> (i32, i32) {
    %c0_i32 = arith.constant 0 : i32
    %c0_i32_0 = arith.constant 0 : i32
    return %arg0, %c0_i32 : i32, i32
  }
  func.func @transform_1(%arg0: i32) -> (i32, i32) {
    %c0_i32 = arith.constant 0 : i32
    %c0_i32_0 = arith.constant 0 : i32
    %c0_i32_1 = arith.constant 0 : i32
    return %c0_i32, %c0_i32_0 : i32, i32
  }
  func.func @transform_2(%arg0: i32) -> (i32, i32) {
    %c0_i32 = arith.constant 0 : i32
    %c0_i32_0 = arith.constant 0 : i32
    %c0_i32_1 = arith.constant 0 : i32
    return %c0_i32, %c0_i32_0 : i32, i32
  }
  func.func @transform_3(%arg0: i32) -> (i32, i32) {
    %c0_i32 = arith.constant 0 : i32
    %c0_i32_0 = arith.constant 0 : i32
    %c0_i32_1 = arith.constant 0 : i32
    return %c0_i32, %c0_i32_0 : i32, i32
  }
  func.func @transform_4(%arg0: i32) -> (i32, i32) {
    %c0_i32 = arith.constant 0 : i32
    %c0_i32_0 = arith.constant 0 : i32
    %c0_i32_1 = arith.constant 0 : i32
    return %c0_i32, %c0_i32_0 : i32, i32
  }
  func.func @transform_5(%arg0: i32) -> (i32, i32) {
    %c0_i32 = arith.constant 0 : i32
    %c0_i32_0 = arith.constant 0 : i32
    %c0_i32_1 = arith.constant 0 : i32
    return %c0_i32, %c0_i32_0 : i32, i32
  }
  func.func @transform_6(%arg0: i32) -> (i32, i32) {
    %c0_i32 = arith.constant 0 : i32
    %c0_i32_0 = arith.constant 0 : i32
    %c0_i32_1 = arith.constant 0 : i32
    return %c0_i32, %c0_i32_0 : i32, i32
  }
  func.func @transform_7(%arg0: i32) -> (i32, i32) {
    %c0_i32 = arith.constant 0 : i32
    %c0_i32_0 = arith.constant 0 : i32
    return %arg0, %c0_i32 : i32, i32
  }
}

</mosaic_0001>

<llo_original>
// kernel: _fused_mlp_call.1
$region0: #{_fused_mlp_call.1}
  #allocation0 [shape = 'u32[]', space=smem, size = 0x4, offset = 0x4, fixed_abs, tag = 'smem constant byte address 0x4 - core index']
  #allocation1 [shape = 'u32[144,128]{1,0:T(1,128)}', space=vmem, size = 0x12000, scoped, tag = 'internal scratch']
  %s0 = inlined_call_operand.hbm [shape: bf16[16,32], index: 0, kind: input, shape index: {}]
  %s1 = inlined_call_operand.hbm [shape: bf16[32,128], index: 1, kind: input, shape index: {}]
  %s2 = inlined_call_operand.vmem [shape: f32[1,128], index: 2, kind: input, shape index: {}]
  %s3 = inlined_call_operand.hbm [shape: bf16[128,128], index: 3, kind: input, shape index: {}]
  %s4 = inlined_call_operand.vmem [shape: f32[1,128], index: 4, kind: input, shape index: {}]
  %s5 = inlined_call_operand.hbm [shape: bf16[128,128], index: 5, kind: input, shape index: {}]
  %s6 = inlined_call_operand.vmem [shape: f32[1,128], index: 6, kind: input, shape index: {}]
  %s7 = inlined_call_operand.hbm [shape: f32[16,128], index: 7, kind: output, shape index: {}]
  %s8 = sld [smem:[#allocation0]]
  $region54: #{_fused_mlp_call.1} parent=0
    _
  %s10 = ssub.s32 1, %s8
  %s11 = scalar_select 0, %s10, %s8
  $region1: #{_fused_mlp_call.1} parent=0
    #allocation2 [shape = 'u8[4096]{0}', space=vmem, size = 0x1000, scoped, tag = 'input window, operand 0, single buffered']
    #allocation3 [shape = 's32[1]{0}', space=sflag, size = 0x4, scoped, tag = 'scoped memory for _fused_mlp_call.1']
    #allocation4 [shape = 's32[1]{0}', space=sflag, size = 0x4, scoped, tag = 'scoped memory for _fused_mlp_call.1']
    #allocation5 [shape = 'u8[8192]{0}', space=vmem, size = 0x2000, scoped, tag = 'input window, operand 1, single buffered']
    #allocation6 [shape = 's32[1]{0}', space=sflag, size = 0x4, scoped, tag = 'scoped memory for _fused_mlp_call.1']
    #allocation7 [shape = 'u8[32768]{0}', space=vmem, size = 0x8000, scoped, tag = 'input window, operand 3, single buffered']
    #allocation8 [shape = 'u8[32768]{0}', space=vmem, size = 0x8000, scoped, tag = 'input window, operand 5, single buffered']
    #allocation9 [shape = 's32[1]{0}', space=sflag, size = 0x4, scoped, tag = 'scoped memory for _fused_mlp_call.1']
    #allocation10 [shape = 'u8[8192]{0}', space=vmem, size = 0x2000, scoped, tag = 'output window, operand 0, single buffered']
    %12 = vsyncpa [#allocation3], 0
    %13 = vsyncpa [#allocation6], 0
    %14 = vsyncpa [#allocation9], 0
    %15 = vsyncpa [#allocation4], 0
    // Predicated region
    $region2: #{_fused_mlp_call.1} parent=1 // pred_check
      _
    $region3: #{_fused_mlp_call.1} parent=1 // pred_check_branch
      %17 = sbr.rel (0) target = $region5
    $region4: #{_fused_mlp_call.1} parent=1 // pred_region
      %s19 = ssub.s32 128, 128
      %20 = vsyncadd [#allocation3], %s19
      %s21 = sshll.u32 [#allocation2], 4
      %s22 = int_to_ptr.vmem [resolvable:$true] %s21
      %27 = dma.hbm_to_vmem [thread:$0]  %s0, 128, %s22, [#allocation3], 64, 64, 4
    $region5: #{_fused_mlp_call.1} parent=1 // pred_fallthru
      _
    // Predicated region
    $region6: #{_fused_mlp_call.1} parent=1 // pred_check
      _
    $region7: #{_fused_mlp_call.1} parent=1 // pred_check_branch
      %29 = sbr.rel (0) target = $region9
    $region8: #{_fused_mlp_call.1} parent=1 // pred_region
      %s31 = ssub.s32 256, 256
      %32 = vsyncadd [#allocation6], %s31
      %s33 = sshll.u32 [#allocation5], 4
      %s34 = int_to_ptr.vmem [resolvable:$true] %s33
      %39 = dma.hbm_to_vmem [thread:$0]  %s1, 256, %s34, [#allocation6], 64, 64, 4
    $region9: #{_fused_mlp_call.1} parent=1 // pred_fallthru
      _
    // Predicated region
    $region10: #{_fused_mlp_call.1} parent=1 // pred_check
      _
    $region11: #{_fused_mlp_call.1} parent=1 // pred_check_branch
      %41 = sbr.rel (0) target = $region13
    $region12: #{_fused_mlp_call.1} parent=1 // pred_region
      _
    $region13: #{_fused_mlp_call.1} parent=1 // pred_fallthru
      _
    // Predicated region
    $region14: #{_fused_mlp_call.1} parent=1 // pred_check
      _
    $region15: #{_fused_mlp_call.1} parent=1 // pred_check_branch
      %43 = sbr.rel (0) target = $region17
    $region16: #{_fused_mlp_call.1} parent=1 // pred_region
      %s45 = ssub.s32 1024, 1024
      %46 = vsyncadd [#allocation6], %s45
      %s47 = sshll.u32 [#allocation7], 4
      %s48 = int_to_ptr.vmem [resolvable:$true] %s47
      %53 = dma.hbm_to_vmem [thread:$0]  %s3, 1024, %s48, [#allocation6], 64, 64, 4
    $region17: #{_fused_mlp_call.1} parent=1 // pred_fallthru
      _
    // Predicated region
    $region18: #{_fused_mlp_call.1} parent=1 // pred_check
      _
    $region19: #{_fused_mlp_call.1} parent=1 // pred_check_branch
      %55 = sbr.rel (0) target = $region21
    $region20: #{_fused_mlp_call.1} parent=1 // pred_region
      _
    $region21: #{_fused_mlp_call.1} parent=1 // pred_fallthru
      _
    // Predicated region
    $region22: #{_fused_mlp_call.1} parent=1 // pred_check
      _
    $region23: #{_fused_mlp_call.1} parent=1 // pred_check_branch
      %57 = sbr.rel (0) target = $region25
    $region24: #{_fused_mlp_call.1} parent=1 // pred_region
      %s59 = ssub.s32 1024, 1024
      %60 = vsyncadd [#allocation9], %s59
      %s61 = sshll.u32 [#allocation8], 4
      %s62 = int_to_ptr.vmem [resolvable:$true] %s61
      %67 = dma.hbm_to_vmem [thread:$0]  %s5, 1024, %s62, [#allocation9], 64, 64, 4
    $region25: #{_fused_mlp_call.1} parent=1 // pred_fallthru
      _
    // Predicated region
    $region26: #{_fused_mlp_call.1} parent=1 // pred_check
      _
    $region27: #{_fused_mlp_call.1} parent=1 // pred_check_branch
      %69 = sbr.rel (0) target = $region29
    $region28: #{_fused_mlp_call.1} parent=1 // pred_region
      _
    $region29: #{_fused_mlp_call.1} parent=1 // pred_fallthru
      _
    // Predicated region
    $region30: #{_fused_mlp_call.1} parent=1 // pred_check
      _
    $region31: #{_fused_mlp_call.1} parent=1 // pred_check_branch
      %71 = sbr.rel (0) target = $region33
    $region32: #{_fused_mlp_call.1} parent=1 // pred_region
      %72 = dma.done [#allocation3], 128
    $region33: #{_fused_mlp_call.1} parent=1 // pred_fallthru
      _
    // Predicated region
    $region34: #{_fused_mlp_call.1} parent=1 // pred_check
      _
    $region35: #{_fused_mlp_call.1} parent=1 // pred_check_branch
      %74 = sbr.rel (0) target = $region37
    $region36: #{_fused_mlp_call.1} parent=1 // pred_region
      %75 = dma.done [#allocation6], 256
    $region37: #{_fused_mlp_call.1} parent=1 // pred_fallthru
      _
    // Predicated region
    $region38: #{_fused_mlp_call.1} parent=1 // pred_check
      _
    $region39: #{_fused_mlp_call.1} parent=1 // pred_check_branch
      %77 = sbr.rel (0) target = $region41
    $region40: #{_fused_mlp_call.1} parent=1 // pred_region
      %78 = dma.done [#allocation6], 1024
    $region41: #{_fused_mlp_call.1} parent=1 // pred_fallthru
      _
    // Predicated region
    $region42: #{_fused_mlp_call.1} parent=1 // pred_check
      _
    $region43: #{_fused_mlp_call.1} parent=1 // pred_check_branch
      %80 = sbr.rel (0) target = $region45
    $region44: #{_fused_mlp_call.1} parent=1 // pred_region
      %81 = dma.done [#allocation9], 1024
    $region45: #{_fused_mlp_call.1} parent=1 // pred_fallthru
      _
    %v83 = vld [vmem:[#allocation2] sm:$0xf]
    %v84 = vld [vmem:[#allocation2 + $0x4] sm:$0xf]
    %v85 = vld [vmem:[#allocation5] sm:$0xf]
    %v86 = vld [vmem:[#allocation5 + $0x4] sm:$0xf]
    %v87 = vld [vmem:[#allocation5 + $0x8] sm:$0xf]
    %v88 = vld [vmem:[#allocation5 + $0xc] sm:$0xf]
    %v89 = vld [vmem:[%s2] sm:$0x1]
    %v91 = vlaneseq
    %v92 = vshrl.u32 %v91, 7
    %v93 = vsub.s32 0, %v92
    %v94 = vrot.slane %v89, %v93
    %v98 = vunpack.c.l.b16 %v83
    %v99 = vunpack.c.l.b16 %v84
    %v100 = vpack.c.b16 %v99, %v98
    %v105 = vunpack.c.l.b16 %v85
    %v106 = vunpack.c.l.b16 %v86
    %v107 = vunpack.c.l.b16 %v87
    %v108 = vunpack.c.l.b16 %v88
    %v109 = vpack.c.b16 %v106, %v105
    %v110 = vpack.c.b16 %v108, %v107
    %vm113 = vcmask 261120
    %v115 = vsel %vm113, %v100, 0
    %117 = vmatprep.subr.bf16.mxu0 0
    %118 = vmatpush1.bf16.msra.mxu0 0
    %119 = vmatprep.subr.bf16.mxu0 0
    %120 = vmatpush1.bf16.msra.mxu0 0
    %121 = vmatprep.subr.bf16.mxu0 0
    %122 = vmatpush1.bf16.msra.mxu0 0
    %123 = vmatprep.subr.bf16.mxu0 0
    %124 = vmatpush1.bf16.msra.mxu0 0
    %125 = vmatprep.subr.bf16.mxu0 0
    %126 = vmatpush1.bf16.msra.mxu0 0
    %127 = vmatprep.subr.bf16.mxu0 0
    %128 = vmatpush1.bf16.msra.mxu0 0
    %129 = vmatprep.subr.bf16.mxu0 0
    %130 = vmatpush1.bf16.msra.mxu0 %v110
    %131 = vmatprep.subr.bf16.mxu0 0
    %132 = vmatpush1.bf16.msra.mxu0 %v109
    %133 = vmatprep.subr.bf16.mxu0 0
    %134 = vmatpush2.bf16.msra.mxu0 0
    %135 = vmatprep.subr.bf16.mxu0 0
    %136 = vmatpush2.bf16.msra.mxu0 0
    %137 = vmatprep.subr.bf16.mxu0 0
    %138 = vmatpush2.bf16.msra.mxu0 0
    %139 = vmatprep.subr.bf16.mxu0 0
    %140 = vmatpush2.bf16.msra.mxu0 0
    %141 = vmatprep.subr.bf16.mxu0 0
    %142 = vmatpush2.bf16.msra.mxu0 0
    %143 = vmatprep.subr.bf16.mxu0 0
    %144 = vmatpush2.bf16.msra.mxu0 0
    %145 = vmatprep.subr.bf16.mxu0 0
    %146 = vmatpush2.bf16.msra.mxu0 0
    %147 = vmatprep.subr.bf16.mxu0 0
    %148 = vmatpush2.bf16.msra.mxu0 0
    %149 = vmatprep.mubr.bf16.mxu0 0
    %150 = vmatmul.mubr.bf16.gmra.mxu0 %v115
    %v151 = vpop.f32.mrf.mxu0
    %v152 = vadd.f32 %v94, %v151
    %v153 = vpop.f32.mrf.mxu0
    %v154 = vpop.f32.mrf.mxu0
    %v155 = vadd.f32 %v94, %v154
    %v156 = vpop.f32.mrf.mxu0
    %157 = vdwg.mxu0
    %v158 = vmax.f32 %v152, 0.0
    %v159 = vmax.f32 %v155, 0.0
    %v160 = vpack.c.bf16 %v159, %v158
    %v161 = vld [vmem:[#allocation7] sm:$0xf]
    %v162 = vld [vmem:[#allocation7 + $0x4] sm:$0xf]
    %v163 = vld [vmem:[#allocation7 + $0x8] sm:$0xf]
    %v164 = vld [vmem:[#allocation7 + $0xc] sm:$0xf]
    %v165 = vld [vmem:[#allocation7 + $0x10] sm:$0xf]
    %v166 = vld [vmem:[#allocation7 + $0x14] sm:$0xf]
    %v167 = vld [vmem:[#allocation7 + $0x18] sm:$0xf]
    %v168 = vld [vmem:[#allocation7 + $0x1c] sm:$0xf]
    %v169 = vld [vmem:[#allocation7 + $0x20] sm:$0xf]
    %v170 = vld [vmem:[#allocation7 + $0x24] sm:$0xf]
    %v171 = vld [vmem:[#allocation7 + $0x28] sm:$0xf]
    %v172 = vld [vmem:[#allocation7 + $0x2c] sm:$0xf]
    %v173 = vld [vmem:[#allocation7 + $0x30] sm:$0xf]
    %v174 = vld [vmem:[#allocation7 + $0x34] sm:$0xf]
    %v175 = vld [vmem:[#allocation7 + $0x38] sm:$0xf]
    %v176 = vld [vmem:[#allocation7 + $0x3c] sm:$0xf]
    %v177 = vld [vmem:[%s4] sm:$0x1]
    %v179 = vlaneseq
    %v180 = vshrl.u32 %v179, 7
    %v181 = vsub.s32 0, %v180
    %v182 = vrot.slane %v177, %v181
    %v200 = vunpack.c.l.b16 %v161
    %v201 = vunpack.c.l.b16 %v162
    %v202 = vunpack.c.l.b16 %v163
    %v203 = vunpack.c.l.b16 %v164
    %v204 = vunpack.c.l.b16 %v165
    %v205 = vunpack.c.l.b16 %v166
    %v206 = vunpack.c.l.b16 %v167
    %v207 = vunpack.c.l.b16 %v168
    %v208 = vunpack.c.l.b16 %v169
    %v209 = vunpack.c.l.b16 %v170
    %v210 = vunpack.c.l.b16 %v171
    %v211 = vunpack.c.l.b16 %v172
    %v212 = vunpack.c.l.b16 %v173
    %v213 = vunpack.c.l.b16 %v174
    %v214 = vunpack.c.l.b16 %v175
    %v215 = vunpack.c.l.b16 %v176
    %v216 = vpack.c.b16 %v201, %v200
    %v217 = vpack.c.b16 %v203, %v202
    %v218 = vpack.c.b16 %v205, %v204
    %v219 = vpack.c.b16 %v207, %v206
    %v220 = vpack.c.b16 %v209, %v208
    %v221 = vpack.c.b16 %v211, %v210
    %v222 = vpack.c.b16 %v213, %v212
    %v223 = vpack.c.b16 %v215, %v214
    %232 = vmatprep.subr.bf16.mxu0 0
    %233 = vmatpush1.bf16.msra.mxu0 %v223
    %234 = vmatprep.subr.bf16.mxu0 0
    %235 = vmatpush1.bf16.msra.mxu0 %v222
    %236 = vmatprep.subr.bf16.mxu0 0
    %237 = vmatpush1.bf16.msra.mxu0 %v221
    %238 = vmatprep.subr.bf16.mxu0 0
    %239 = vmatpush1.bf16.msra.mxu0 %v220
    %240 = vmatprep.subr.bf16.mxu0 0
    %241 = vmatpush1.bf16.msra.mxu0 %v219
    %242 = vmatprep.subr.bf16.mxu0 0
    %243 = vmatpush1.bf16.msra.mxu0 %v218
    %244 = vmatprep.subr.bf16.mxu0 0
    %245 = vmatpush1.bf16.msra.mxu0 %v217
    %246 = vmatprep.subr.bf16.mxu0 0
    %247 = vmatpush1.bf16.msra.mxu0 %v216
    %248 = vmatprep.subr.bf16.mxu0 0
    %249 = vmatpush2.bf16.msra.mxu0 0
    %250 = vmatprep.subr.bf16.mxu0 0
    %251 = vmatpush2.bf16.msra.mxu0 0
    %252 = vmatprep.subr.bf16.mxu0 0
    %253 = vmatpush2.bf16.msra.mxu0 0
    %254 = vmatprep.subr.bf16.mxu0 0
    %255 = vmatpush2.bf16.msra.mxu0 0
    %256 = vmatprep.subr.bf16.mxu0 0
    %257 = vmatpush2.bf16.msra.mxu0 0
    %258 = vmatprep.subr.bf16.mxu0 0
    %259 = vmatpush2.bf16.msra.mxu0 0
    %260 = vmatprep.subr.bf16.mxu0 0
    %261 = vmatpush2.bf16.msra.mxu0 0
    %262 = vmatprep.subr.bf16.mxu0 0
    %263 = vmatpush2.bf16.msra.mxu0 0
    %264 = vmatprep.mubr.bf16.mxu0 0
    %265 = vmatmul.mubr.bf16.gmra.mxu0 %v160
    %v266 = vpop.f32.mrf.mxu0
    %v267 = vadd.f32 %v182, %v266
    %v268 = vpop.f32.mrf.mxu0
    %v269 = vpop.f32.mrf.mxu0
    %v270 = vadd.f32 %v182, %v269
    %v271 = vpop.f32.mrf.mxu0
    %272 = vdwg.mxu0
    %v273 = vtanh.pop %v267
    %v274 = vtanh.pop %v270
    %v275 = vpack.c.bf16 %v274, %v273
    %v276 = vld [vmem:[#allocation8] sm:$0xf]
    %v277 = vld [vmem:[#allocation8 + $0x4] sm:$0xf]
    %v278 = vld [vmem:[#allocation8 + $0x8] sm:$0xf]
    %v279 = vld [vmem:[#allocation8 + $0xc] sm:$0xf]
    %v280 = vld [vmem:[#allocation8 + $0x10] sm:$0xf]
    %v281 = vld [vmem:[#allocation8 + $0x14] sm:$0xf]
    %v282 = vld [vmem:[#allocation8 + $0x18] sm:$0xf]
    %v283 = vld [vmem:[#allocation8 + $0x1c] sm:$0xf]
    %v284 = vld [vmem:[#allocation8 + $0x20] sm:$0xf]
    %v285 = vld [vmem:[#allocation8 + $0x24] sm:$0xf]
    %v286 = vld [vmem:[#allocation8 + $0x28] sm:$0xf]
    %v287 = vld [vmem:[#allocation8 + $0x2c] sm:$0xf]
    %v288 = vld [vmem:[#allocation8 + $0x30] sm:$0xf]
    %v289 = vld [vmem:[#allocation8 + $0x34] sm:$0xf]
    %v290 = vld [vmem:[#allocation8 + $0x38] sm:$0xf]
    %v291 = vld [vmem:[#allocation8 + $0x3c] sm:$0xf]
    %v292 = vld [vmem:[%s6] sm:$0x1]
    %v294 = vlaneseq
    %v295 = vshrl.u32 %v294, 7
    %v296 = vsub.s32 0, %v295
    %v297 = vrot.slane %v292, %v296
    %v315 = vunpack.c.l.b16 %v276
    %v316 = vunpack.c.l.b16 %v277
    %v317 = vunpack.c.l.b16 %v278
    %v318 = vunpack.c.l.b16 %v279
    %v319 = vunpack.c.l.b16 %v280
    %v320 = vunpack.c.l.b16 %v281
    %v321 = vunpack.c.l.b16 %v282
    %v322 = vunpack.c.l.b16 %v283
    %v323 = vunpack.c.l.b16 %v284
    %v324 = vunpack.c.l.b16 %v285
    %v325 = vunpack.c.l.b16 %v286
    %v326 = vunpack.c.l.b16 %v287
    %v327 = vunpack.c.l.b16 %v288
    %v328 = vunpack.c.l.b16 %v289
    %v329 = vunpack.c.l.b16 %v290
    %v330 = vunpack.c.l.b16 %v291
    %v331 = vpack.c.b16 %v316, %v315
    %v332 = vpack.c.b16 %v318, %v317
    %v333 = vpack.c.b16 %v320, %v319
    %v334 = vpack.c.b16 %v322, %v321
    %v335 = vpack.c.b16 %v324, %v323
    %v336 = vpack.c.b16 %v326, %v325
    %v337 = vpack.c.b16 %v328, %v327
    %v338 = vpack.c.b16 %v330, %v329
    %347 = vmatprep.subr.bf16.mxu0 0
    %348 = vmatpush1.bf16.msra.mxu0 %v338
    %349 = vmatprep.subr.bf16.mxu0 0
    %350 = vmatpush1.bf16.msra.mxu0 %v337
    %351 = vmatprep.subr.bf16.mxu0 0
    %352 = vmatpush1.bf16.msra.mxu0 %v336
    %353 = vmatprep.subr.bf16.mxu0 0
    %354 = vmatpush1.bf16.msra.mxu0 %v335
    %355 = vmatprep.subr.bf16.mxu0 0
    %356 = vmatpush1.bf16.msra.mxu0 %v334
    %357 = vmatprep.subr.bf16.mxu0 0
    %358 = vmatpush1.bf16.msra.mxu0 %v333
    %359 = vmatprep.subr.bf16.mxu0 0
    %360 = vmatpush1.bf16.msra.mxu0 %v332
    %361 = vmatprep.subr.bf16.mxu0 0
    %362 = vmatpush1.bf16.msra.mxu0 %v331
    %363 = vmatprep.subr.bf16.mxu0 0
    %364 = vmatpush2.bf16.msra.mxu0 0
    %365 = vmatprep.subr.bf16.mxu0 0
    %366 = vmatpush2.bf16.msra.mxu0 0
    %367 = vmatprep.subr.bf16.mxu0 0
    %368 = vmatpush2.bf16.msra.mxu0 0
    %369 = vmatprep.subr.bf16.mxu0 0
    %370 = vmatpush2.bf16.msra.mxu0 0
    %371 = vmatprep.subr.bf16.mxu0 0
    %372 = vmatpush2.bf16.msra.mxu0 0
    %373 = vmatprep.subr.bf16.mxu0 0
    %374 = vmatpush2.bf16.msra.mxu0 0
    %375 = vmatprep.subr.bf16.mxu0 0
    %376 = vmatpush2.bf16.msra.mxu0 0
    %377 = vmatprep.subr.bf16.mxu0 0
    %378 = vmatpush2.bf16.msra.mxu0 0
    %379 = vmatprep.mubr.bf16.mxu0 0
    %380 = vmatmul.mubr.bf16.gmra.mxu0 %v275
    %v381 = vpop.f32.mrf.mxu0
    %v382 = vadd.f32 %v297, %v381
    %v383 = vpop.f32.mrf.mxu0
    %v384 = vpop.f32.mrf.mxu0
    %v385 = vadd.f32 %v297, %v384
    %v386 = vpop.f32.mrf.mxu0
    %387 = vdwg.mxu0
    %388 = vst [vmem:[#allocation10] sm:$0xff] %v382
    %389 = vst [vmem:[#allocation10 + $0x8] sm:$0xff] %v385
    // Predicated region
    $region46: #{_fused_mlp_call.1} parent=1 // pred_check
      _
    $region47: #{_fused_mlp_call.1} parent=1 // pred_check_branch
      %391 = sbr.rel (0) target = $region49
    $region48: #{_fused_mlp_call.1} parent=1 // pred_region
      %s393 = ssub.s32 256, 256
      %394 = vsyncadd [#allocation4], %s393
      %s395 = sshll.u32 [#allocation10], 4
      %s396 = int_to_ptr.vmem [resolvable:$true] %s395
      %401 = dma.vmem_to_hbm [thread:$0]  %s396, 256, %s7, [#allocation4], 128, 128, 8
    $region49: #{_fused_mlp_call.1} parent=1 // pred_fallthru
      _
    // Predicated region
    $region50: #{_fused_mlp_call.1} parent=1 // pred_check
      _
    $region51: #{_fused_mlp_call.1} parent=1 // pred_check_branch
      %403 = sbr.rel (0) target = $region53
    $region52: #{_fused_mlp_call.1} parent=1 // pred_region
      %404 = dma.done [#allocation4], 256
    $region53: #{_fused_mlp_call.1} parent=1 // pred_fallthru
      _
    %405 = vsyncpa [#allocation3], 1
    %406 = vsyncpa [#allocation6], 1
    %407 = vsyncpa [#allocation9], 1
    %408 = vsyncpa [#allocation4], 1

</llo_original>
